<compile_context>
chip_gen: v7x
topology: tpu7x:2x2x1
jax: 0.10.0
libtpu: 0.0.40
codegen_flags: <defaults>
</compile_context>

<pallas_src>
import jax
import jax.numpy as jnp
from jax.experimental import pallas as pl
from jax.experimental.pallas import tpu as pltpu

_MAX_TILE_ROWS = 512      # cap on the M/P tile (sublane dim); amortizes ~0.35us/step
_TILE_BUDGET = 12 << 20   # target bytes for the double-buffered x+out tiles per step
_VMEM_CAP = 48 << 20      # scoped-VMEM ceiling that is safe on v5e/v6e/v7x


def _shared_kernel(x_ref, w_ref, b_ref, o_ref):
    # x_ref: (TM, H)   w_ref: (H, O)   b_ref: (1, O)   o_ref: (TM, O)
    acc = jnp.dot(x_ref[...], w_ref[...], preferred_element_type=jnp.float32)
    o_ref[...] = (acc + b_ref[...].astype(jnp.float32)).astype(o_ref.dtype)


def _individual_kernel(x_ref, w_ref, b_ref, o_ref):
    # x_ref: (B, TP, H)  w_ref: (H, O)  b_ref: (1, O)  o_ref: (B, TP, O)
    w = w_ref[...]
    bias = b_ref[...].astype(jnp.float32)
    # Unrolled 2-D dots over the small, static batch dim: keeps W_c loaded across
    # the unroll and feeds the MXU back-to-back (TP,H)@(H,O) passes with no
    # in-kernel reshape (reshapes are not views and can materialize VMEM copies).
    for bi in range(x_ref.shape[0]):
        acc = jnp.dot(x_ref[bi], w, preferred_element_type=jnp.float32)
        o_ref[bi] = (acc + bias).astype(o_ref.dtype)


def _pick_rows(full, row_bytes, override=None):
    """Tile size along a sublane (second-to-last) dim.

    Full extent when it already fits the budget, otherwise a multiple of 8
    capped at _MAX_TILE_ROWS and sized so double-buffered tiles fit _TILE_BUDGET.
    """
    if override is not None:
        t = int(override)
        if t >= full:
            return full
        return max(8, (t // 8) * 8)
    cap = max(8, min(_MAX_TILE_ROWS, _TILE_BUDGET // max(int(row_bytes), 1)))
    if full <= cap:
        return full
    return max(8, (cap // 8) * 8)


def _vmem_limit(ws_bytes):
    return int(min(_VMEM_CAP, max(32 << 20, 2 * int(ws_bytes))))


def patch_channel_head(x, weight, bias, *, individual, tile_m=None, tile_p=None):
    """
    x      : (B, C, P, H)
    weight : (C, H, O) if individual else (H, O)   [in_dim, out_dim layout]
    bias   : (C, O)    if individual else (O,)
    returns: (B, C, P, O)
    """
    B, C, P, H = x.shape
    O = weight.shape[-1]
    itemsize = x.dtype.itemsize

    if individual:
        b = bias.reshape(C, 1, O)
        # Bytes per row of P for the double-buffered x and out tiles.
        row_bytes = 2 * B * (H + O) * itemsize
        tp = _pick_rows(P, row_bytes, tile_p)
        grid = (C, pl.cdiv(P, tp))
        ws = (2 * B * tp * (H + O) * itemsize
              + (H * O + O) * weight.dtype.itemsize
              + B * tp * O * 4)
        cost = pl.CostEstimate(
            flops=2 * B * C * P * H * O,
            transcendentals=0,
            bytes_accessed=(B * C * P * (H + O) + C * (H * O + O)) * itemsize)
        return pl.pallas_call(
            _individual_kernel,
            out_shape=jax.ShapeDtypeStruct((B, C, P, O), x.dtype),
            grid=grid,
            in_specs=[
                pl.BlockSpec((B, None, tp, H), lambda ci, pj: (0, ci, pj, 0)),
                # weight/bias index_maps are constant over the inner axis, so W_c
                # is fetched once per channel and stays resident across P tiles.
                pl.BlockSpec((None, H, O), lambda ci, pj: (ci, 0, 0)),
                pl.BlockSpec((None, 1, O), lambda ci, pj: (ci, 0, 0)),
            ],
            out_specs=pl.BlockSpec((B, None, tp, O), lambda ci, pj: (0, ci, pj, 0)),
            compiler_params=pltpu.CompilerParams(
                dimension_semantics=("parallel", "parallel"),
                vmem_limit_bytes=_vmem_limit(ws),
            ),
            cost_estimate=cost,
        )(x, weight, b)

    # ---- shared Linear: one big GEMM over the flattened (B*C*P, H) matrix ----
    M = B * C * P
    x_flat = x.reshape(M, H)              # contiguous -> metadata-only reshape
    w = weight.reshape(H, O)
    b = bias.reshape(1, O)

    row_bytes = 2 * (H + O) * itemsize
    tm = _pick_rows(M, row_bytes, tile_m)
    # Ragged last M block: padding-row reads are garbage but their writes are
    # masked and never reach HBM; the op is row-independent, so no pad/slice.
    grid_m = pl.cdiv(M, tm)
    ws = 2 * tm * (H + O) * itemsize + (H * O + O) * w.dtype.itemsize + tm * O * 4
    cost = pl.CostEstimate(
        flops=2 * M * H * O,
        transcendentals=0,
        bytes_accessed=(M * (H + O) + H * O + O) * itemsize)

    out_flat = pl.pallas_call(
        _shared_kernel,
        out_shape=jax.ShapeDtypeStruct((M, O), x.dtype),
        grid=(grid_m,),
        in_specs=[
            pl.BlockSpec((tm, H), lambda i: (i, 0)),
            pl.BlockSpec((H, O), lambda i: (0, 0)),   # resident (constant block)
            pl.BlockSpec((1, O), lambda i: (0, 0)),
        ],
        out_specs=pl.BlockSpec((tm, O), lambda i: (i, 0)),
        compiler_params=pltpu.CompilerParams(
            dimension_semantics=("parallel",),
            vmem_limit_bytes=_vmem_limit(ws),
        ),
        cost_estimate=cost,
    )(x_flat, w, b)

    return out_flat.reshape(B, C, P, O)


def _torch_linear_init(key, in_dim, out_dim, leading=()):
    """Deterministic nn.Linear-style init: U(-1/sqrt(in), 1/sqrt(in))."""
    bound = 1.0 / (in_dim ** 0.5)
    kw, kb = jax.random.split(key)
    w = jax.random.uniform(kw, leading + (in_dim, out_dim),
                           minval=-bound, maxval=bound, dtype=jnp.float32)
    b = jax.random.uniform(kb, leading + (out_dim,),
                           minval=-bound, maxval=bound, dtype=jnp.float32)
    return w, b


if __name__ == "__main__":
    key = jax.random.PRNGKey(0)
    kx, kw_i, kw_s, kx2 = jax.random.split(key, 4)

    # ---- primary small shapes: x = [B, n_channel, patch_num, h_dim] ----
    B, C, P, H, O = 2, 4, 8, 32, 64
    x = jax.random.normal(kx, (B, C, P, H), dtype=jnp.float32)

    # individual = True : one Linear per channel
    w_ind, b_ind = _torch_linear_init(kw_i, H, O, leading=(C,))
    out_ind = jax.block_until_ready(
        patch_channel_head(x, w_ind, b_ind, individual=True))
    ref_ind = jnp.einsum("bcph,cho->bcpo", x, w_ind) + b_ind[None, :, None, :]
    assert out_ind.shape == (B, C, P, O)
    assert jnp.allclose(out_ind, ref_ind, atol=1e-4, rtol=1e-4)

    # individual = False : shared Linear
    w_sh, b_sh = _torch_linear_init(kw_s, H, O)
    out_sh = jax.block_until_ready(
        patch_channel_head(x, w_sh, b_sh, individual=False))
    ref_sh = jnp.einsum("bcph,ho->bcpo", x, w_sh) + b_sh
    assert out_sh.shape == (B, C, P, O)
    assert jnp.allclose(out_sh, ref_sh, atol=1e-4, rtol=1e-4)

    # ---- ragged-tile test (tile does not divide the row count; masked edge) ----
    B2, C2, P2 = 2, 3, 12
    x2 = jax.random.normal(kx2, (B2, C2, P2, H), dtype=jnp.float32)
    w_i2, b_i2 = _torch_linear_init(kw_i, H, O, leading=(C2,))
    out_i2 = jax.block_until_ready(
        patch_channel_head(x2, w_i2, b_i2, individual=True, tile_p=8))
    ref_i2 = jnp.einsum("bcph,cho->bcpo", x2, w_i2) + b_i2[None, :, None, :]
    assert jnp.allclose(out_i2, ref_i2, atol=1e-4, rtol=1e-4)

    out_s2 = jax.block_until_ready(
        patch_channel_head(x2, w_sh, b_sh, individual=False, tile_m=16))
    ref_s2 = jnp.einsum("bcph,ho->bcpo", x2, w_sh) + b_sh
    assert jnp.allclose(out_s2, ref_s2, atol=1e-4, rtol=1e-4)

    # ---- bf16 input path (f32 accumulation + f32 bias add inside the kernel) ----
    x_bf = x.astype(jnp.bfloat16)
    w_bf = w_sh.astype(jnp.bfloat16)
    b_bf = b_sh.astype(jnp.bfloat16)
    out_bf = jax.block_until_ready(
        patch_channel_head(x_bf, w_bf, b_bf, individual=False))
    ref_bf = (jnp.einsum("bcph,ho->bcpo",
                         x_bf.astype(jnp.float32), w_bf.astype(jnp.float32))
              + b_bf.astype(jnp.float32))
    assert out_bf.dtype == jnp.bfloat16
    assert jnp.allclose(out_bf.astype(jnp.float32), ref_bf, atol=5e-2, rtol=5e-2)

    print("KERNEL_OK")
</pallas_src>

<mosaic_0001>
module attributes {stable_mosaic.version = 11 : i64} {
  func.func @_individual_kernel(%arg0: i32, %arg1: i32, %arg2: memref<2x1x8x32xf32, #tpu.memory_space<vmem>>, %arg3: memref<1x32x64xf32, #tpu.memory_space<vmem>>, %arg4: memref<1x1x64xf32, #tpu.memory_space<vmem>>, %arg5: memref<2x1x8x64xf32, #tpu.memory_space<vmem>>) attributes {dimension_semantics = [#tpu.dimension_semantics<parallel>, #tpu.dimension_semantics<parallel>], iteration_bounds = array<i64: 4, 1>, scalar_prefetch = 0 : i64, scratch_operands = 0 : i64, tpu.core_type = #tpu.core_type<tc>, window_params = [{transform_indices = @transform_0, window_bounds = array<i64: 2, 1, 8, 32>}, {transform_indices = @transform_1, window_bounds = array<i64: 1, 32, 64>}, {transform_indices = @transform_2, window_bounds = array<i64: 1, 1, 64>}, {transform_indices = @transform_3, window_bounds = array<i64: 2, 1, 8, 64>}]} {
    %c0 = arith.constant 0 : index
    %c0_0 = arith.constant 0 : index
    %c0_1 = arith.constant 0 : index
    %0 = vector.load %arg3[%c0, %c0_0, %c0_1] : memref<1x32x64xf32, #tpu.memory_space<vmem>>, vector<1x32x64xf32>
    %1 = vector.shape_cast %0 : vector<1x32x64xf32> to vector<32x64xf32>
    %c0_2 = arith.constant 0 : index
    %c0_3 = arith.constant 0 : index
    %c0_4 = arith.constant 0 : index
    %2 = vector.load %arg4[%c0_2, %c0_3, %c0_4] : memref<1x1x64xf32, #tpu.memory_space<vmem>>, vector<1x1x64xf32>
    %3 = vector.shape_cast %2 : vector<1x1x64xf32> to vector<1x64xf32>
    %c0_5 = arith.constant 0 : index
    %c0_6 = arith.constant 0 : index
    %c0_7 = arith.constant 0 : index
    %c0_8 = arith.constant 0 : index
    %4 = vector.load %arg2[%c0_5, %c0_6, %c0_7, %c0_8] : memref<2x1x8x32xf32, #tpu.memory_space<vmem>>, vector<1x1x8x32xf32>
    %5 = vector.shape_cast %4 : vector<1x1x8x32xf32> to vector<8x32xf32>
    %cst = arith.constant dense<0.000000e+00> : vector<8x64xf32>
    %6 = tpu.matmul %5, %1, %cst {dimension_numbers = #tpu.dot_dimension_numbers<[1], [0], [0], [1], [0, 0, 1, 1], [], []>} : vector<8x32xf32>, vector<32x64xf32>, vector<8x64xf32> -> vector<8x64xf32>
    %7 = vector.broadcast %3 : vector<1x64xf32> to vector<8x64xf32>
    %8 = arith.addf %6, %7 : vector<8x64xf32>
    %c0_9 = arith.constant 0 : index
    %c0_10 = arith.constant 0 : index
    %c0_11 = arith.constant 0 : index
    %c0_12 = arith.constant 0 : index
    %9 = vector.load %arg5[%c0_9, %c0_10, %c0_11, %c0_12] : memref<2x1x8x64xf32, #tpu.memory_space<vmem>>, vector<1x1x8x64xf32>
    %10 = vector.shape_cast %9 : vector<1x1x8x64xf32> to vector<8x64xf32>
    %11 = vector.shape_cast %8 : vector<8x64xf32> to vector<1x1x8x64xf32>
    tpu.vector_store %arg5[%c0_9, %c0_10, %c0_11, %c0_12], %11 {strides = array<i32>} : memref<2x1x8x64xf32, #tpu.memory_space<vmem>>, vector<1x1x8x64xf32>,
    %c1 = arith.constant 1 : index
    %c0_13 = arith.constant 0 : index
    %c0_14 = arith.constant 0 : index
    %c0_15 = arith.constant 0 : index
    %12 = vector.load %arg2[%c1, %c0_13, %c0_14, %c0_15] : memref<2x1x8x32xf32, #tpu.memory_space<vmem>>, vector<1x1x8x32xf32>
    %13 = vector.shape_cast %12 : vector<1x1x8x32xf32> to vector<8x32xf32>
    %cst_16 = arith.constant dense<0.000000e+00> : vector<8x64xf32>
    %14 = tpu.matmul %13, %1, %cst_16 {dimension_numbers = #tpu.dot_dimension_numbers<[1], [0], [0], [1], [0, 0, 1, 1], [], []>} : vector<8x32xf32>, vector<32x64xf32>, vector<8x64xf32> -> vector<8x64xf32>
    %15 = vector.broadcast %3 : vector<1x64xf32> to vector<8x64xf32>
    %16 = arith.addf %14, %15 : vector<8x64xf32>
    %c1_17 = arith.constant 1 : index
    %c0_18 = arith.constant 0 : index
    %c0_19 = arith.constant 0 : index
    %c0_20 = arith.constant 0 : index
    %17 = vector.load %arg5[%c1_17, %c0_18, %c0_19, %c0_20] : memref<2x1x8x64xf32, #tpu.memory_space<vmem>>, vector<1x1x8x64xf32>
    %18 = vector.shape_cast %17 : vector<1x1x8x64xf32> to vector<8x64xf32>
    %19 = vector.shape_cast %16 : vector<8x64xf32> to vector<1x1x8x64xf32>
    tpu.vector_store %arg5[%c1_17, %c0_18, %c0_19, %c0_20], %19 {strides = array<i32>} : memref<2x1x8x64xf32, #tpu.memory_space<vmem>>, vector<1x1x8x64xf32>,
    return
  }
  func.func @transform_0(%arg0: i32, %arg1: i32) -> (i32, i32, i32, i32) {
    %c0_i32 = arith.constant 0 : i32
    %c0_i32_0 = arith.constant 0 : i32
    %c0_i32_1 = arith.constant 0 : i32
    return %c0_i32, %arg0, %arg1, %c0_i32_0 : i32, i32, i32, i32
  }
  func.func @transform_1(%arg0: i32, %arg1: i32) -> (i32, i32, i32) {
    %c0_i32 = arith.constant 0 : i32
    %c0_i32_0 = arith.constant 0 : i32
    %c0_i32_1 = arith.constant 0 : i32
    return %arg0, %c0_i32, %c0_i32_0 : i32, i32, i32
  }
  func.func @transform_2(%arg0: i32, %arg1: i32) -> (i32, i32, i32) {
    %c0_i32 = arith.constant 0 : i32
    %c0_i32_0 = arith.constant 0 : i32
    %c0_i32_1 = arith.constant 0 : i32
    return %arg0, %c0_i32, %c0_i32_0 : i32, i32, i32
  }
  func.func @transform_3(%arg0: i32, %arg1: i32) -> (i32, i32, i32, i32) {
    %c0_i32 = arith.constant 0 : i32
    %c0_i32_0 = arith.constant 0 : i32
    %c0_i32_1 = arith.constant 0 : i32
    return %c0_i32, %arg0, %arg1, %c0_i32_0 : i32, i32, i32, i32
  }
}

</mosaic_0001>

<llo_original>
// kernel: tpu_custom_call.1
$region0: #{tpu_custom_call.1}
  #allocation0 [shape = 'u32[]', space=smem, size = 0x4, offset = 0x4, fixed_abs, tag = 'smem constant byte address 0x4 - core index']
  #allocation1 [shape = 'u32[144,128]{1,0:T(1,128)}', space=vmem, size = 0x12000, scoped, tag = 'internal scratch']
  %s0 = inlined_call_operand.hbm [shape: f32[2,4,8,32], index: 0, kind: input, shape index: {}]
  %s1 = inlined_call_operand.hbm [shape: f32[4,32,64], index: 1, kind: input, shape index: {}]
  %s2 = inlined_call_operand.vmem [shape: f32[4,1,64], index: 2, kind: input, shape index: {}]
  %s3 = inlined_call_operand.hbm [shape: f32[2,4,8,64], index: 3, kind: output, shape index: {}]
  %s4 = sld [smem:[#allocation0]]
  $region53: #{tpu_custom_call.1} parent=0
    _
  %s6 = ssub.s32 1, %s4
  %s7 = scalar_select 0, %s6, %s4
  $region1: #{tpu_custom_call.1} parent=0
    #allocation2 [shape = 'u8[16384]{0}', space=vmem, size = 0x4000, scoped, tag = 'input window, operand 0']
    #allocation3 [shape = 's32[2]{0}', space=sflag, size = 0x8, scoped, tag = 'scoped memory for tpu_custom_call.1']
    #allocation4 [shape = 's32[2]{0}', space=sflag, size = 0x8, scoped, tag = 'scoped memory for tpu_custom_call.1']
    #allocation5 [shape = 'u8[32768]{0}', space=vmem, size = 0x8000, scoped, tag = 'input window, operand 1']
    #allocation6 [shape = 's32[2]{0}', space=sflag, size = 0x8, scoped, tag = 'scoped memory for tpu_custom_call.1']
    #allocation7 [shape = 'u8[16384]{0}', space=vmem, size = 0x4000, scoped, tag = 'output window, operand 0']
    %8 = vsyncpa [#allocation3], 0
    %s9 = scalar_lea.sflag [#allocation3], 1
    %10 = vsyncpa %s9, 0
    %11 = vsyncpa [#allocation6], 0
    %s12 = scalar_lea.sflag [#allocation6], 1
    %13 = vsyncpa %s12, 0
    %14 = vsyncpa [#allocation4], 0
    %s15 = scalar_lea.sflag [#allocation4], 1
    %16 = vsyncpa %s15, 0
    loop: start=0, step=1, limit=6
    $region2: #{tpu_custom_call.1} parent=1 // loop_pre_header
      _
    $region3: #{tpu_custom_call.1} parent=1 // loop_header
      %s18 = sphi 0, %s22
      %p19 = scmp.ge.s32.totalorder %s18, 6
      %s25 = sphi 0, %s37
      %s26 = sphi 0, %s33
      %s27 = sphi 0, %s25
      %s28 = sphi 0, %s26
      %s29 = sphi 0, %s27
      %s30 = sphi 0, %s28
      %s42 = sphi 0, %s44
      %s45 = sphi 0, %s42
      %s46 = sphi 0, %s45
      %s62 = sphi 0, %s46
      %s68 = sphi 0, %s70
      %s71 = sphi 0, %s68
      %s72 = sphi 0, %s71
      %s88 = sphi 0, %s72
      %s94 = sphi 0, %s96
      %s97 = sphi 0, %s94
      %s98 = sphi 0, %s97
      %s114 = sphi 0, %s98
      %s122 = sphi 0, %s124
      %s125 = sphi 0, %s122
      %s126 = sphi 0, %s125
      %s142 = sphi 0, %s126
    $region4: #{tpu_custom_call.1} parent=1 // loop_header_branch
      %21 = sbr.rel (%p19) target = $region8
    $region5: #{tpu_custom_call.1} parent=1 // loop_body
      %s23 = ssub.s32 %s18, 1
      %s24 = ssub.s32 %s18, 2
      %s31 = sadd.s32 1, %s26
      %p32 = scmp.ge.s32.totalorder %s31, 1
      %s33 = scalar_select %p32, 0, %s31
      %s34 = sadd.s32 1, %s25
      %s35 = scalar_select %p32, %s34, %s25
      %p36 = scmp.ge.s32.totalorder %s35, 4
      %s37 = scalar_select %p36, 0, %s35
      %s38 = ssub.s32 %s25, %s37
      %s39 = ssub.s32 %s26, %s33
      %s40 = sor.u32 %s38, %s39
      %p41 = scmp.eq.s32.totalorder %s40, 0
      %s43 = sadd.s32 %s42, 1
      %s44 = scalar_select %p41, %s42, %s43
      %p47 = pneg %p41
      %p48 = scmp.eq.s32.totalorder %s18, 3
      %p49 = por %p47, %p48
      %p50 = scmp.ne.s32.totalorder %s42, %s45
      %p51 = scmp.eq.s32.totalorder %s18, 0
      %p52 = por %p50, %p51
      %p53 = scmp.ne.s32.totalorder %s42, %s45
      %p54 = scmp.eq.s32.totalorder %s23, 3
      %p55 = por %p53, %p54
      %p56 = scmp.ne.s32.totalorder %s45, %s46
      %p57 = scmp.eq.s32.totalorder %s23, 0
      %p58 = por %p56, %p57
      %p59 = scmp.ne.s32.totalorder %s45, %s46
      %p60 = scmp.eq.s32.totalorder %s24, 3
      %p61 = por %p59, %p60
      %p63 = scmp.ne.s32.totalorder %s46, %s62
      %p64 = scmp.eq.s32.totalorder %s24, 0
      %p65 = por %p63, %p64
      %s66 = ssub.s32 %s25, %s37
      %p67 = scmp.eq.s32.totalorder %s66, 0
      %s69 = sadd.s32 %s68, 1
      %s70 = scalar_select %p67, %s68, %s69
      %p73 = pneg %p67
      %p74 = scmp.eq.s32.totalorder %s18, 3
      %p75 = por %p73, %p74
      %p76 = scmp.ne.s32.totalorder %s68, %s71
      %p77 = scmp.eq.s32.totalorder %s18, 0
      %p78 = por %p76, %p77
      %p79 = scmp.ne.s32.totalorder %s68, %s71
      %p80 = scmp.eq.s32.totalorder %s23, 3
      %p81 = por %p79, %p80
      %p82 = scmp.ne.s32.totalorder %s71, %s72
      %p83 = scmp.eq.s32.totalorder %s23, 0
      %p84 = por %p82, %p83
      %p85 = scmp.ne.s32.totalorder %s71, %s72
      %p86 = scmp.eq.s32.totalorder %s24, 3
      %p87 = por %p85, %p86
      %p89 = scmp.ne.s32.totalorder %s72, %s88
      %p90 = scmp.eq.s32.totalorder %s24, 0
      %p91 = por %p89, %p90
      %s92 = ssub.s32 %s25, %s37
      %p93 = scmp.eq.s32.totalorder %s92, 0
      %s95 = sadd.s32 %s94, 1
      %s96 = scalar_select %p93, %s94, %s95
      %p99 = pneg %p93
      %p100 = scmp.eq.s32.totalorder %s18, 3
      %p101 = por %p99, %p100
      %p102 = scmp.ne.s32.totalorder %s94, %s97
      %p103 = scmp.eq.s32.totalorder %s18, 0
      %p104 = por %p102, %p103
      %p105 = scmp.ne.s32.totalorder %s94, %s97
      %p106 = scmp.eq.s32.totalorder %s23, 3
      %p107 = por %p105, %p106
      %p108 = scmp.ne.s32.totalorder %s97, %s98
      %p109 = scmp.eq.s32.totalorder %s23, 0
      %p110 = por %p108, %p109
      %p111 = scmp.ne.s32.totalorder %s97, %s98
      %p112 = scmp.eq.s32.totalorder %s24, 3
      %p113 = por %p111, %p112
      %p115 = scmp.ne.s32.totalorder %s98, %s114
      %p116 = scmp.eq.s32.totalorder %s24, 0
      %p117 = por %p115, %p116
      %s118 = ssub.s32 %s25, %s37
      %s119 = ssub.s32 %s26, %s33
      %s120 = sor.u32 %s118, %s119
      %p121 = scmp.eq.s32.totalorder %s120, 0
      %s123 = sadd.s32 %s122, 1
      %s124 = scalar_select %p121, %s122, %s123
      %p127 = pneg %p121
      %p128 = scmp.eq.s32.totalorder %s18, 3
      %p129 = por %p127, %p128
      %p130 = scmp.ne.s32.totalorder %s122, %s125
      %p131 = scmp.eq.s32.totalorder %s18, 0
      %p132 = por %p130, %p131
      %p133 = scmp.ne.s32.totalorder %s122, %s125
      %p134 = scmp.eq.s32.totalorder %s23, 3
      %p135 = por %p133, %p134
      %p136 = scmp.ne.s32.totalorder %s125, %s126
      %p137 = scmp.eq.s32.totalorder %s23, 0
      %p138 = por %p136, %p137
      %p139 = scmp.ne.s32.totalorder %s125, %s126
      %p140 = scmp.eq.s32.totalorder %s24, 3
      %p141 = por %p139, %p140
      %p143 = scmp.ne.s32.totalorder %s126, %s142
      %p144 = scmp.eq.s32.totalorder %s24, 0
      %p145 = por %p143, %p144
      %p146 = scmp.le.s32.totalorder 1, %s18
      %p147 = scmp.lt.s32.totalorder %s18, 5
      %p148 = pnand %p146, %p147
      %p149 = pneg %p148
      // Predicated region
      $region9: #{tpu_custom_call.1} parent=5 // pred_check
        _
      $region10: #{tpu_custom_call.1} parent=5 // pred_check_branch
        %151 = sbr.rel (%p148) target = $region12
      $region11: #{tpu_custom_call.1} parent=5 // pred_region
        %s152 = ssub.s32 %s18, 1
      $region12: #{tpu_custom_call.1} parent=5 // pred_fallthru
        _
      %p153 = scmp.lt.s32.totalorder %s18, 4
      // Predicated region
      $region13: #{tpu_custom_call.1} parent=5 // pred_check
        %p154 = pneg %p153
      $region14: #{tpu_custom_call.1} parent=5 // pred_check_branch
        %156 = sbr.rel (%p154) target = $region16
      $region15: #{tpu_custom_call.1} parent=5 // pred_region
        // Predicated region
        $region17: #{tpu_custom_call.1} parent=15 // pred_check
          %p157 = pneg %p52
        $region18: #{tpu_custom_call.1} parent=15 // pred_check_branch
          %159 = sbr.rel (%p157) target = $region20
        $region19: #{tpu_custom_call.1} parent=15 // pred_region
          %s160 = sand.u32 %s42, 1
          %s161 = scalar_lea.sflag [#allocation3], %s160
          %s162 = sand.u32 %s42, 1
          %s163 = smul.addr %s162, 16
          %s164 = scalar_lea.vmem [#allocation2], %s163
          %s166 = ssub.s32 256, 256
          %167 = vsyncadd %s161, %s166
          %s168 = sadd.s32 %s26, %s25
          %s169 = smul.addr %s168, 128
          %s170 = scalar_lea.hbm %s0, %s169
          %s171 = sshll.u32 %s164, 4
          %s172 = int_to_ptr.vmem [resolvable:$true] %s171
          %177 = dma.hbm_to_vmem [thread:$0]  %s170, 256, %s172, %s161, 512, 128, 8
        $region20: #{tpu_custom_call.1} parent=15 // pred_fallthru
          _
        // Predicated region
        $region21: #{tpu_custom_call.1} parent=15 // pred_check
          %p178 = pneg %p78
        $region22: #{tpu_custom_call.1} parent=15 // pred_check_branch
          %180 = sbr.rel (%p178) target = $region24
        $region23: #{tpu_custom_call.1} parent=15 // pred_region
          %s181 = sand.u32 %s68, 1
          %s182 = scalar_lea.sflag [#allocation6], %s181
          %s183 = sand.u32 %s68, 1
          %s184 = smul.addr %s183, 32
          %s185 = scalar_lea.vmem [#allocation5], %s184
          %s187 = ssub.s32 512, 512
          %188 = vsyncadd %s182, %s187
          %s189 = smul.addr %s25, 4
          %s190 = smul.addr %s189, 128
          %s191 = scalar_lea.hbm %s1, %s190
          %s192 = sshll.u32 %s185, 4
          %s193 = int_to_ptr.vmem [resolvable:$true] %s192
          %198 = dma.hbm_to_vmem [thread:$0]  %s191, 512, %s193, %s182, 128, 128, 8
        $region24: #{tpu_custom_call.1} parent=15 // pred_fallthru
          _
        // Predicated region
        $region25: #{tpu_custom_call.1} parent=15 // pred_check
          %p199 = pneg %p104
        $region26: #{tpu_custom_call.1} parent=15 // pred_check_branch
          %201 = sbr.rel (%p199) target = $region28
        $region27: #{tpu_custom_call.1} parent=15 // pred_region
          %p202 = scmp.lt.s32.totalorder %s25, 3
          %s203 = scalar_select %p202, %s25, 3
          %s204 = scalar_lea.vmem %s2, %s203
        $region28: #{tpu_custom_call.1} parent=15 // pred_fallthru
          _
      $region16: #{tpu_custom_call.1} parent=5 // pred_fallthru
        _
      %p205 = scmp.le.s32.totalorder 1, %s18
      %p206 = scmp.lt.s32.totalorder %s18, 5
      %p207 = pnand %p205, %p206
      %p208 = pneg %p207
      // Predicated region
      $region29: #{tpu_custom_call.1} parent=5 // pred_check
        _
      $region30: #{tpu_custom_call.1} parent=5 // pred_check_branch
        %210 = sbr.rel (%p207) target = $region32
      $region31: #{tpu_custom_call.1} parent=5 // pred_region
        %s211 = ssub.s32 %s18, 1
        %s212 = sand.u32 %s45, 1
        %s213 = scalar_lea.sflag [#allocation3], %s212
        %s214 = sand.u32 %s45, 1
        %s215 = smul.addr %s214, 16
        %s216 = scalar_lea.vmem [#allocation2], %s215
        // Predicated region
        $region33: #{tpu_custom_call.1} parent=31 // pred_check
          %p217 = pneg %p58
        $region34: #{tpu_custom_call.1} parent=31 // pred_check_branch
          %219 = sbr.rel (%p217) target = $region36
        $region35: #{tpu_custom_call.1} parent=31 // pred_region
          %220 = dma.done %s213, 256
        $region36: #{tpu_custom_call.1} parent=31 // pred_fallthru
          _
        %s221 = sand.u32 %s71, 1
        %s222 = scalar_lea.sflag [#allocation6], %s221
        %s223 = sand.u32 %s71, 1
        %s224 = smul.addr %s223, 32
        %s225 = scalar_lea.vmem [#allocation5], %s224
        // Predicated region
        $region37: #{tpu_custom_call.1} parent=31 // pred_check
          %p226 = pneg %p84
        $region38: #{tpu_custom_call.1} parent=31 // pred_check_branch
          %228 = sbr.rel (%p226) target = $region40
        $region39: #{tpu_custom_call.1} parent=31 // pred_region
          %229 = dma.done %s222, 512
        $region40: #{tpu_custom_call.1} parent=31 // pred_fallthru
          _
        %s230 = sand.u32 %s45, 1
        %s231 = scalar_lea.sflag [#allocation3], %s230
        %s232 = sand.u32 %s45, 1
        %s233 = smul.addr %s232, 16
        %s234 = scalar_lea.vmem [#allocation2], %s233
        %p235 = pneg %p58
        %p236 = pneg %p55
        %s237 = sand.u32 %s71, 1
        %s238 = scalar_lea.sflag [#allocation6], %s237
        %s239 = sand.u32 %s71, 1
        %s240 = smul.addr %s239, 32
        %s241 = scalar_lea.vmem [#allocation5], %s240
        %p242 = pneg %p84
        %p243 = pneg %p81
        %p244 = scmp.lt.s32.totalorder %s27, 3
        %s245 = scalar_select %p244, %s27, 3
        %s246 = scalar_lea.vmem %s2, %s245
        %p247 = pneg %p110
        %p248 = pneg %p107
        %p249 = pneg %p138
        %p250 = pneg %p135
        %s251 = sand.u32 %s125, 1
        %s252 = scalar_lea.sflag [#allocation4], %s251
        %s253 = sand.u32 %s125, 1
        %s254 = smul.addr %s253, 16
        %s255 = scalar_lea.vmem [#allocation7], %s254
        %p256 = scmp.lt.s32.totalorder %s27, 3
        %s257 = scalar_select %p256, %s27, 3
        %s258 = scalar_lea.vmem %s2, %s257
        %v259 = vld [vmem:[%s225] sm:$0xff]
        %v260 = vld [vmem:[%s225 + $0x8] sm:$0xff]
        %v261 = vld [vmem:[%s225 + $0x10] sm:$0xff]
        %v262 = vld [vmem:[%s225 + $0x18] sm:$0xff]
        %v263 = vld [vmem:[%s258] sm:$0x1]
        %v264 = vld [vmem:[%s216] sm:$0xff]
        %v266 = vlaneseq
        %v267 = vshrl.u32 %v266, 7
        %v268 = vsub.s32 0, %v267
        %v269 = vrot.slane %v263, %v268
        %vm271 = vcmask 261120
        %v273 = vsel %vm271, %v264, 0
        %275 = vmatprep.subr.mxu0 0.0
        %276 = vmatpush1.msra.mxu0 %v259
        %277 = vmatprep.subr.mxu0 0.0
        %278 = vmatpush1.msra.mxu0 %v260
        %279 = vmatprep.subr.mxu0 0.0
        %280 = vmatpush1.msra.mxu0 %v261
        %281 = vmatprep.subr.mxu0 0.0
        %282 = vmatpush1.msra.mxu0 %v262
        %283 = vmatprep.subr.mxu0 0.0
        %284 = vmatpush1.msra.mxu0 0.0
        %285 = vmatprep.subr.mxu0 0.0
        %286 = vmatpush1.msra.mxu0 0.0
        %287 = vmatprep.subr.mxu0 0.0
        %288 = vmatpush1.msra.mxu0 0.0
        %289 = vmatprep.subr.mxu0 0.0
        %290 = vmatpush1.msra.mxu0 0.0
        %291 = vmatprep.subr.mxu0 0.0
        %292 = vmatpush1.msra.mxu0 0.0
        %293 = vmatprep.subr.mxu0 0.0
        %294 = vmatpush1.msra.mxu0 0.0
        %295 = vmatprep.subr.mxu0 0.0
        %296 = vmatpush1.msra.mxu0 0.0
        %297 = vmatprep.subr.mxu0 0.0
        %298 = vmatpush1.msra.mxu0 0.0
        %299 = vmatprep.subr.mxu0 0.0
        %300 = vmatpush1.msra.mxu0 0.0
        %301 = vmatprep.subr.mxu0 0.0
        %302 = vmatpush1.msra.mxu0 0.0
        %303 = vmatprep.subr.mxu0 0.0
        %304 = vmatpush1.msra.mxu0 0.0
        %305 = vmatprep.subr.mxu0 0.0
        %306 = vmatpush1.msra.mxu0 0.0
        %307 = vmatprep.subr.mxu0 0.0
        %308 = vmatpush1.msra.mxu0 0.0
        %309 = vmatprep.subr.mxu0 0.0
        %310 = vmatpush1.msra.mxu0 0.0
        %311 = vmatprep.subr.mxu0 0.0
        %312 = vmatpush1.msra.mxu0 0.0
        %313 = vmatprep.subr.mxu0 0.0
        %314 = vmatpush1.msra.mxu0 0.0
        %315 = vmatprep.subr.mxu0 0.0
        %316 = vmatpush1.msra.mxu0 0.0
        %317 = vmatprep.subr.mxu0 0.0
        %318 = vmatpush1.msra.mxu0 0.0
        %319 = vmatprep.subr.mxu0 0.0
        %320 = vmatpush1.msra.mxu0 0.0
        %321 = vmatprep.subr.mxu0 0.0
        %322 = vmatpush1.msra.mxu0 0.0
        %323 = vmatprep.subr.mxu0 0.0
        %324 = vmatpush1.msra.mxu0 0.0
        %325 = vmatprep.subr.mxu0 0.0
        %326 = vmatpush1.msra.mxu0 0.0
        %327 = vmatprep.subr.mxu0 0.0
        %328 = vmatpush1.msra.mxu0 0.0
        %329 = vmatprep.subr.mxu0 0.0
        %330 = vmatpush1.msra.mxu0 0.0
        %331 = vmatprep.subr.mxu0 0.0
        %332 = vmatpush1.msra.mxu0 0.0
        %333 = vmatprep.subr.mxu0 0.0
        %334 = vmatpush1.msra.mxu0 0.0
        %335 = vmatprep.subr.mxu0 0.0
        %336 = vmatpush1.msra.mxu0 0.0
        %337 = vmatprep.subr.mxu0 0.0
        %338 = vmatpush1.msra.mxu0 0.0
        %339 = vmatprep.mubr.f32.mxu0 0.0
        %340 = vmatmul.mubr.f32.gmra.mrb[0].mxu0 %v273
        %v341 = vpop.f32.mrb[0].mxu0
        %v342 = vadd.f32 %v269, %v341
        %v343 = vpop.f32.mrb[0].mxu0
        %344 = vdwg.mxu0
        %vm345 = vcmask 523264
        %346 = vst.msk [vmem:[%s255] sm:$0xff] %vm345, %v342
        %s347 = scalar_lea.vmem %s216, 8 [#allocation2]
        %v348 = vld [vmem:[%s347] sm:$0xff]
        %v350 = vsel %vm271, %v348, 0
        %352 = vmatprep.subr.mxu0 0.0
        %353 = vmatpush1.msra.mxu0 %v259
        %354 = vmatprep.subr.mxu0 0.0
        %355 = vmatpush1.msra.mxu0 %v260
        %356 = vmatprep.subr.mxu0 0.0
        %357 = vmatpush1.msra.mxu0 %v261
        %358 = vmatprep.subr.mxu0 0.0
        %359 = vmatpush1.msra.mxu0 %v262
        %360 = vmatprep.subr.mxu0 0.0
        %361 = vmatpush1.msra.mxu0 0.0
        %362 = vmatprep.subr.mxu0 0.0
        %363 = vmatpush1.msra.mxu0 0.0
        %364 = vmatprep.subr.mxu0 0.0
        %365 = vmatpush1.msra.mxu0 0.0
        %366 = vmatprep.subr.mxu0 0.0
        %367 = vmatpush1.msra.mxu0 0.0
        %368 = vmatprep.subr.mxu0 0.0
        %369 = vmatpush1.msra.mxu0 0.0
        %370 = vmatprep.subr.mxu0 0.0
        %371 = vmatpush1.msra.mxu0 0.0
        %372 = vmatprep.subr.mxu0 0.0
        %373 = vmatpush1.msra.mxu0 0.0
        %374 = vmatprep.subr.mxu0 0.0
        %375 = vmatpush1.msra.mxu0 0.0
        %376 = vmatprep.subr.mxu0 0.0
        %377 = vmatpush1.msra.mxu0 0.0
        %378 = vmatprep.subr.mxu0 0.0
        %379 = vmatpush1.msra.mxu0 0.0
        %380 = vmatprep.subr.mxu0 0.0
        %381 = vmatpush1.msra.mxu0 0.0
        %382 = vmatprep.subr.mxu0 0.0
        %383 = vmatpush1.msra.mxu0 0.0
        %384 = vmatprep.subr.mxu0 0.0
        %385 = vmatpush1.msra.mxu0 0.0
        %386 = vmatprep.subr.mxu0 0.0
        %387 = vmatpush1.msra.mxu0 0.0
        %388 = vmatprep.subr.mxu0 0.0
        %389 = vmatpush1.msra.mxu0 0.0
        %390 = vmatprep.subr.mxu0 0.0
        %391 = vmatpush1.msra.mxu0 0.0
        %392 = vmatprep.subr.mxu0 0.0
        %393 = vmatpush1.msra.mxu0 0.0
        %394 = vmatprep.subr.mxu0 0.0
        %395 = vmatpush1.msra.mxu0 0.0
        %396 = vmatprep.subr.mxu0 0.0
        %397 = vmatpush1.msra.mxu0 0.0
        %398 = vmatprep.subr.mxu0 0.0
        %399 = vmatpush1.msra.mxu0 0.0
        %400 = vmatprep.subr.mxu0 0.0
        %401 = vmatpush1.msra.mxu0 0.0
        %402 = vmatprep.subr.mxu0 0.0
        %403 = vmatpush1.msra.mxu0 0.0
        %404 = vmatprep.subr.mxu0 0.0
        %405 = vmatpush1.msra.mxu0 0.0
        %406 = vmatprep.subr.mxu0 0.0
        %407 = vmatpush1.msra.mxu0 0.0
        %408 = vmatprep.subr.mxu0 0.0
        %409 = vmatpush1.msra.mxu0 0.0
        %410 = vmatprep.subr.mxu0 0.0
        %411 = vmatpush1.msra.mxu0 0.0
        %412 = vmatprep.subr.mxu0 0.0
        %413 = vmatpush1.msra.mxu0 0.0
        %414 = vmatprep.subr.mxu0 0.0
        %415 = vmatpush1.msra.mxu0 0.0
        %416 = vmatprep.mubr.f32.mxu0 0.0
        %417 = vmatmul.mubr.f32.gmra.mrb[0].mxu0 %v350
        %v418 = vpop.f32.mrb[0].mxu0
        %v419 = vadd.f32 %v269, %v418
        %v420 = vpop.f32.mrb[0].mxu0
        %421 = vdwg.mxu0
        %s422 = scalar_lea.vmem %s255, 8 [#allocation7]
        %423 = vst.msk [vmem:[%s422] sm:$0xff] %vm345, %v419
        %s424 = sand.u32 %s125, 1
        %s425 = scalar_lea.sflag [#allocation4], %s424
        %s426 = sand.u32 %s125, 1
        %s427 = smul.addr %s426, 16
        %s428 = scalar_lea.vmem [#allocation7], %s427
        // Predicated region
        $region41: #{tpu_custom_call.1} parent=31 // pred_check
          %p429 = pneg %p135
        $region42: #{tpu_custom_call.1} parent=31 // pred_check_branch
          %431 = sbr.rel (%p429) target = $region44
        $region43: #{tpu_custom_call.1} parent=31 // pred_region
          %s433 = ssub.s32 256, 256
          %434 = vsyncadd %s425, %s433
          %s435 = sadd.s32 %s28, %s27
          %s436 = smul.addr %s435, 128
          %s437 = scalar_lea.hbm %s3, %s436
          %s438 = sshll.u32 %s428, 4
          %s439 = int_to_ptr.vmem [resolvable:$true] %s438
          %444 = dma.vmem_to_hbm [thread:$0]  %s439, 256, %s437, %s425, 128, 512, 8
        $region44: #{tpu_custom_call.1} parent=31 // pred_fallthru
          _
      $region32: #{tpu_custom_call.1} parent=5 // pred_fallthru
        _
      %p445 = scmp.le.s32.totalorder 2, %s18
      // Predicated region
      $region45: #{tpu_custom_call.1} parent=5 // pred_check
        %p446 = pneg %p445
      $region46: #{tpu_custom_call.1} parent=5 // pred_check_branch
        %448 = sbr.rel (%p446) target = $region48
      $region47: #{tpu_custom_call.1} parent=5 // pred_region
        %s449 = ssub.s32 %s18, 2
        // Predicated region
        $region49: #{tpu_custom_call.1} parent=47 // pred_check
          %p450 = pneg %p141
        $region50: #{tpu_custom_call.1} parent=47 // pred_check_branch
          %452 = sbr.rel (%p450) target = $region52
        $region51: #{tpu_custom_call.1} parent=47 // pred_region
          %s453 = sand.u32 %s126, 1
          %s454 = scalar_lea.sflag [#allocation4], %s453
          %s455 = sand.u32 %s126, 1
          %s456 = smul.addr %s455, 16
          %s457 = scalar_lea.vmem [#allocation7], %s456
          %458 = dma.done %s454, 256
        $region52: #{tpu_custom_call.1} parent=47 // pred_fallthru
          _
      $region48: #{tpu_custom_call.1} parent=5 // pred_fallthru
        _
    $region6: #{tpu_custom_call.1} parent=1 // loop_footer
      %s22 = sadd.s32 1, %s18
    $region7: #{tpu_custom_call.1} parent=1 // loop_footer_branch
      %17 = sbr.rel target = $region3
    $region8: #{tpu_custom_call.1} parent=1 // loop_exit
      _
    %459 = vsyncpa [#allocation3], 1
    %s460 = scalar_lea.sflag [#allocation3], 1
    %461 = vsyncpa %s460, 1
    %462 = vsyncpa [#allocation6], 1
    %s463 = scalar_lea.sflag [#allocation6], 1
    %464 = vsyncpa %s463, 1
    %465 = vsyncpa [#allocation4], 1
    %s466 = scalar_lea.sflag [#allocation4], 1
    %467 = vsyncpa %s466, 1

</llo_original>
